<compile_context>
chip_gen: v5e
topology: v5e:2x2
jax: 0.10.0
libtpu: 0.0.40
codegen_flags: <defaults>
</compile_context>

<pallas_src>
import functools

import jax
import jax.numpy as jnp
from jax import lax
from jax.experimental import pallas as pl
from jax.experimental.pallas import tpu as pltpu


def _num_tensorcores():
    """Best-effort count of TensorCores one kernel can shard over (2 on v7x)."""
    try:
        info = pltpu.get_tpu_info()
    except Exception:
        return 1
    for attr in ("num_tensorcores", "tensorcores_per_chip", "num_cores",
                 "cores_per_chip", "core_count"):
        v = getattr(info, attr, None)
        if v is None:
            continue
        try:
            v = int(v)
        except (TypeError, ValueError):
            continue
        if v >= 1:
            return min(v, 8)
    return 1


def _mlp_kernel(x_ref, w0_ref, b0_ref, w1_ref, b1_ref, w2_ref, b2_ref, o_ref,
                *, chunk):
    # SoA layout: x_ref (input_size, tn), o_ref (output_size, tn).  The big
    # particle axis sits on the 128-wide lane dim -> dense, unmasked loads and
    # stores.  All three layers are fused per `chunk` lanes so intermediates
    # never materialize as full (feat, tn) VMEM tiles.
    w0 = w0_ref[...]
    w1 = w1_ref[...]
    w2 = w2_ref[...]
    b0 = b0_ref[...]          # (hidden, 1) f32 -> lane broadcast in the add
    b1 = b1_ref[...]
    b2 = b2_ref[...]
    num_chunks = x_ref.shape[1] // chunk

    def body(c, carry):
        j = pl.multiple_of(c * chunk, chunk)
        x = x_ref[:, pl.ds(j, chunk)]
        h = jnp.dot(w0, x, preferred_element_type=jnp.float32)
        h = jnp.maximum(h + b0, 0.0).astype(x.dtype)       # bias+ReLU in f32
        h = jnp.dot(w1, h, preferred_element_type=jnp.float32)
        h = jnp.maximum(h + b1, 0.0).astype(x.dtype)
        y = jnp.dot(w2, h, preferred_element_type=jnp.float32) + b2
        o_ref[:, pl.ds(j, chunk)] = y.astype(o_ref.dtype)
        return carry

    lax.fori_loop(0, num_chunks, body, None, unroll=True)


def particle_predictor_soa(x_t, params, *, tile_n=32768,
                           compute_dtype=jnp.bfloat16, out_dtype=None):
    """SoA / lane-dense entry point (the performance path).

    x_t: [input_size, n_particles]  ->  [output_size, n_particles]

    No wrapper-side transposes: particles stay on the lane axis end to end.
    `compute_dtype` is the HBM/MXU storage dtype of x and the weights (bf16 by
    default, halving the dominant HBM read traffic); matmul accumulation, bias
    add and ReLU are always f32.  For large n, supplying n as a multiple of
    the tile avoids the pad/slice copies on the ragged tail.
    """
    w0, b0, w1, b1, w2, b2 = params
    input_size, n = x_t.shape
    hidden_size = w0.shape[0]
    output_size = w2.shape[0]
    cdt = jnp.dtype(compute_dtype) if compute_dtype is not None else x_t.dtype
    odt = jnp.dtype(out_dtype) if out_dtype is not None else x_t.dtype

    # ---- particle tiling (lane axis; multiples of 128) ----------------------
    lane = 128
    ntc = _num_tensorcores()
    n_lane = pl.cdiv(n, lane) * lane
    tn = max(lane, min((tile_n // lane) * lane, n_lane))
    if ntc > 1:
        # v7x: step count a multiple of the TC count (balanced cores), and
        # >= 2 steps per core when there is enough work (per-core pipelining).
        min_steps = ntc * (2 if n_lane >= 2 * ntc * lane else 1)
        steps = max(min_steps, ntc * pl.cdiv(n_lane, tn * ntc))
        tn = pl.cdiv(pl.cdiv(n_lane, steps), lane) * lane
    else:
        # v5e / v6e: single TensorCore -> no forced split; fewer, bigger steps.
        steps = pl.cdiv(n_lane, tn)
    n_pad = steps * tn

    # Inner compute chunk (<=1024 lanes): all three layers per chunk so the
    # (hidden, .) intermediates stay register-resident.
    chunk = tn
    for c in (1024, 512, 256, 128):
        if tn % c == 0:
            chunk = c
            break

    xt = x_t.astype(cdt)
    if n_pad != n:
        # Ragged n: pad the lane axis (padded garbage columns are computed but
        # sliced off below -- do not remove that slice).
        xt = jnp.pad(xt, ((0, 0), (0, n_pad - n)))

    w0c = w0.astype(cdt)
    w1c = w1.astype(cdt)
    w2c = w2.astype(cdt)
    b0c = b0.reshape(hidden_size, 1).astype(jnp.float32)
    b1c = b1.reshape(hidden_size, 1).astype(jnp.float32)
    b2c = b2.reshape(output_size, 1).astype(jnp.float32)

    const = lambda shape: pl.BlockSpec(shape, lambda i: (0, 0))

    yt = pl.pallas_call(
        functools.partial(_mlp_kernel, chunk=chunk),
        out_shape=jax.ShapeDtypeStruct((output_size, n_pad), odt),
        grid_spec=pltpu.PrefetchScalarGridSpec(
            num_scalar_prefetch=0,
            grid=(steps,),
            in_specs=[
                pl.BlockSpec((input_size, tn), lambda i: (0, i)),   # x tile
                const((hidden_size, input_size)),                   # w0
                const((hidden_size, 1)),                            # b0
                const((hidden_size, hidden_size)),                  # w1
                const((hidden_size, 1)),                            # b1
                const((output_size, hidden_size)),                  # w2
                const((output_size, 1)),                            # b2
            ],
            out_specs=pl.BlockSpec((output_size, tn), lambda i: (0, i)),
        ),
        compiler_params=pltpu.CompilerParams(
            dimension_semantics=("parallel",),
            vmem_limit_bytes=32 * 1024 * 1024),
    )(xt, w0c, b0c, w1c, b1c, w2c, b2c)

    if n_pad != n:
        yt = yt[:, :n]
    return yt


def particle_predictor(x, params, *, tile_n=32768, compute_dtype=jnp.bfloat16):
    """PyTorch-module-compatible interface: [n, input_size] -> [n, output_size].

    NOTE: the two transposes here are layout plumbing *outside* the kernel
    (each is an extra HBM pass); callers that can keep particle features SoA
    should call particle_predictor_soa directly and skip them.
    """
    y_t = particle_predictor_soa(x.T, params, tile_n=tile_n,
                                 compute_dtype=compute_dtype,
                                 out_dtype=x.dtype)
    return y_t.T


def init_params(key, input_size, hidden_size, output_size, dtype=jnp.float32):
    """Deterministic synthetic params, PyTorch layout: W [out, in], b [out]."""
    ks = jax.random.split(key, 6)

    def lin(kw, kb, fan_in, fan_out):
        bound = float(fan_in) ** -0.5
        w = jax.random.uniform(kw, (fan_out, fan_in), dtype, -bound, bound)
        b = jax.random.uniform(kb, (fan_out,), dtype, -bound, bound)
        return w, b

    w0, b0 = lin(ks[0], ks[1], input_size, hidden_size)
    w1, b1 = lin(ks[2], ks[3], hidden_size, hidden_size)
    w2, b2 = lin(ks[4], ks[5], hidden_size, output_size)
    return (w0, b0, w1, b1, w2, b2)


def reference(x, params):
    w0, b0, w1, b1, w2, b2 = params
    h = jnp.maximum(x @ w0.T + b0, 0.0)
    h = jnp.maximum(h @ w1.T + b1, 0.0)
    return h @ w2.T + b2


if __name__ == "__main__":
    key = jax.random.PRNGKey(0)
    n_particles, input_size, hidden_size, output_size = 256, 16, 32, 8

    kx, kp = jax.random.split(key)
    x = jax.random.normal(kx, (n_particles, input_size), jnp.float32)
    params = init_params(kp, input_size, hidden_size, output_size)
    ref = reference(x, params)

    # SoA (performance) path, f32 storage: tight match to the reference.
    x_soa = x.T                      # test-harness layout change only
    y_soa = jax.block_until_ready(
        particle_predictor_soa(x_soa, params, compute_dtype=jnp.float32))
    assert y_soa.shape == (output_size, n_particles)
    assert jnp.allclose(y_soa.T, ref, atol=1e-5, rtol=1e-5)

    # SoA path with the default bf16 storage (f32 accumulation): loose tol
    # accounts for rounding x / W to bf16 before the first matmul.
    y_soa_bf16 = jax.block_until_ready(particle_predictor_soa(x_soa, params))
    assert y_soa_bf16.shape == (output_size, n_particles)
    assert jnp.allclose(y_soa_bf16.T, ref, atol=5e-2, rtol=5e-2)

    # Module-compatible interface ([n, in] -> [n, out]), f32 path.
    out = jax.block_until_ready(
        particle_predictor(x, params, compute_dtype=jnp.float32))
    assert out.shape == (n_particles, output_size)
    assert jnp.allclose(out, ref, atol=1e-5, rtol=1e-5)

    # Ragged n_particles (exercises lane padding + tail slicing).
    x2 = jax.random.normal(kx, (200, input_size), jnp.float32)
    out2 = jax.block_until_ready(
        particle_predictor(x2, params, compute_dtype=jnp.float32))
    assert out2.shape == (200, output_size)
    assert jnp.allclose(out2, reference(x2, params), atol=1e-5, rtol=1e-5)

    print("KERNEL_OK")
</pallas_src>

<mosaic_0001>
module attributes {stable_mosaic.version = 11 : i64} {
  func.func @_mlp_kernel(%arg0: i32, %arg1: memref<16x256xf32, #tpu.memory_space<vmem>>, %arg2: memref<32x16xf32, #tpu.memory_space<vmem>>, %arg3: memref<32x1xf32, #tpu.memory_space<vmem>>, %arg4: memref<32x32xf32, #tpu.memory_space<vmem>>, %arg5: memref<32x1xf32, #tpu.memory_space<vmem>>, %arg6: memref<8x32xf32, #tpu.memory_space<vmem>>, %arg7: memref<8x1xf32, #tpu.memory_space<vmem>>, %arg8: memref<8x256xf32, #tpu.memory_space<vmem>>) attributes {dimension_semantics = [#tpu.dimension_semantics<parallel>], iteration_bounds = array<i64: 1>, scalar_prefetch = 0 : i64, scratch_operands = 0 : i64, tpu.core_type = #tpu.core_type<tc>, window_params = [{transform_indices = @transform_0, window_bounds = array<i64: 16, 256>}, {pipeline_mode = #tpu.pipeline_mode<synchronous>, transform_indices = @transform_1, window_bounds = array<i64: 32, 16>}, {pipeline_mode = #tpu.pipeline_mode<synchronous>, transform_indices = @transform_2, window_bounds = array<i64: 32, 1>}, {pipeline_mode = #tpu.pipeline_mode<synchronous>, transform_indices = @transform_3, window_bounds = array<i64: 32, 32>}, {pipeline_mode = #tpu.pipeline_mode<synchronous>, transform_indices = @transform_4, window_bounds = array<i64: 32, 1>}, {pipeline_mode = #tpu.pipeline_mode<synchronous>, transform_indices = @transform_5, window_bounds = array<i64: 8, 32>}, {pipeline_mode = #tpu.pipeline_mode<synchronous>, transform_indices = @transform_6, window_bounds = array<i64: 8, 1>}, {transform_indices = @transform_7, window_bounds = array<i64: 8, 256>}]} {
    %c0 = arith.constant 0 : index
    %c0_0 = arith.constant 0 : index
    %0 = vector.load %arg2[%c0, %c0_0] : memref<32x16xf32, #tpu.memory_space<vmem>>, vector<32x16xf32>
    %c0_1 = arith.constant 0 : index
    %c0_2 = arith.constant 0 : index
    %1 = vector.load %arg4[%c0_1, %c0_2] : memref<32x32xf32, #tpu.memory_space<vmem>>, vector<32x32xf32>
    %c0_3 = arith.constant 0 : index
    %c0_4 = arith.constant 0 : index
    %2 = vector.load %arg6[%c0_3, %c0_4] : memref<8x32xf32, #tpu.memory_space<vmem>>, vector<8x32xf32>
    %c0_5 = arith.constant 0 : index
    %c0_6 = arith.constant 0 : index
    %3 = vector.load %arg3[%c0_5, %c0_6] : memref<32x1xf32, #tpu.memory_space<vmem>>, vector<32x1xf32>
    %c0_7 = arith.constant 0 : index
    %c0_8 = arith.constant 0 : index
    %4 = vector.load %arg5[%c0_7, %c0_8] : memref<32x1xf32, #tpu.memory_space<vmem>>, vector<32x1xf32>
    %c0_9 = arith.constant 0 : index
    %c0_10 = arith.constant 0 : index
    %5 = vector.load %arg7[%c0_9, %c0_10] : memref<8x1xf32, #tpu.memory_space<vmem>>, vector<8x1xf32>
    %c0_i32 = arith.constant 0 : i32
    %c256_i32 = arith.constant 256 : i32
    %6 = arith.muli %c0_i32, %c256_i32 : i32
    %7 = tpu.assume_multiple %6, 256 : i32
    %c0_11 = arith.constant 0 : index
    %8 = arith.index_cast %7 : i32 to index
    %9 = vector.load %arg1[%c0_11, %8] : memref<16x256xf32, #tpu.memory_space<vmem>>, vector<16x256xf32>
    %cst = arith.constant dense<0.000000e+00> : vector<32x256xf32>
    %10 = tpu.matmul %0, %9, %cst {dimension_numbers = #tpu.dot_dimension_numbers<[1], [0], [0], [1], [0, 0, 1, 1], [], []>} : vector<32x16xf32>, vector<16x256xf32>, vector<32x256xf32> -> vector<32x256xf32>
    %11 = vector.broadcast %3 : vector<32x1xf32> to vector<32x256xf32>
    %12 = arith.addf %10, %11 : vector<32x256xf32>
    %cst_12 = arith.constant 0.000000e+00 : f32
    %13 = vector.broadcast %cst_12 : f32 to vector<32x256xf32>
    %14 = arith.maximumf %12, %13 : vector<32x256xf32>
    %cst_13 = arith.constant dense<0.000000e+00> : vector<32x256xf32>
    %15 = tpu.matmul %1, %14, %cst_13 {dimension_numbers = #tpu.dot_dimension_numbers<[1], [0], [0], [1], [0, 0, 1, 1], [], []>} : vector<32x32xf32>, vector<32x256xf32>, vector<32x256xf32> -> vector<32x256xf32>
    %16 = vector.broadcast %4 : vector<32x1xf32> to vector<32x256xf32>
    %17 = arith.addf %15, %16 : vector<32x256xf32>
    %cst_14 = arith.constant 0.000000e+00 : f32
    %18 = vector.broadcast %cst_14 : f32 to vector<32x256xf32>
    %19 = arith.maximumf %17, %18 : vector<32x256xf32>
    %cst_15 = arith.constant dense<0.000000e+00> : vector<8x256xf32>
    %20 = tpu.matmul %2, %19, %cst_15 {dimension_numbers = #tpu.dot_dimension_numbers<[1], [0], [0], [1], [0, 0, 1, 1], [], []>} : vector<8x32xf32>, vector<32x256xf32>, vector<8x256xf32> -> vector<8x256xf32>
    %21 = vector.broadcast %5 : vector<8x1xf32> to vector<8x256xf32>
    %22 = arith.addf %20, %21 : vector<8x256xf32>
    %c0_16 = arith.constant 0 : index
    %23 = arith.index_cast %7 : i32 to index
    %24 = vector.load %arg8[%c0_16, %23] : memref<8x256xf32, #tpu.memory_space<vmem>>, vector<8x256xf32>
    tpu.vector_store %arg8[%c0_16, %23], %22 {strides = array<i32>} : memref<8x256xf32, #tpu.memory_space<vmem>>, vector<8x256xf32>,
    %c1_i32 = arith.constant 1 : i32
    return
  }
  func.func @transform_0(%arg0: i32) -> (i32, i32) {
    %c0_i32 = arith.constant 0 : i32
    %c0_i32_0 = arith.constant 0 : i32
    return %c0_i32, %arg0 : i32, i32
  }
  func.func @transform_1(%arg0: i32) -> (i32, i32) {
    %c0_i32 = arith.constant 0 : i32
    %c0_i32_0 = arith.constant 0 : i32
    %c0_i32_1 = arith.constant 0 : i32
    return %c0_i32, %c0_i32_0 : i32, i32
  }
  func.func @transform_2(%arg0: i32) -> (i32, i32) {
    %c0_i32 = arith.constant 0 : i32
    %c0_i32_0 = arith.constant 0 : i32
    %c0_i32_1 = arith.constant 0 : i32
    return %c0_i32, %c0_i32_0 : i32, i32
  }
  func.func @transform_3(%arg0: i32) -> (i32, i32) {
    %c0_i32 = arith.constant 0 : i32
    %c0_i32_0 = arith.constant 0 : i32
    %c0_i32_1 = arith.constant 0 : i32
    return %c0_i32, %c0_i32_0 : i32, i32
  }
  func.func @transform_4(%arg0: i32) -> (i32, i32) {
    %c0_i32 = arith.constant 0 : i32
    %c0_i32_0 = arith.constant 0 : i32
    %c0_i32_1 = arith.constant 0 : i32
    return %c0_i32, %c0_i32_0 : i32, i32
  }
  func.func @transform_5(%arg0: i32) -> (i32, i32) {
    %c0_i32 = arith.constant 0 : i32
    %c0_i32_0 = arith.constant 0 : i32
    %c0_i32_1 = arith.constant 0 : i32
    return %c0_i32, %c0_i32_0 : i32, i32
  }
  func.func @transform_6(%arg0: i32) -> (i32, i32) {
    %c0_i32 = arith.constant 0 : i32
    %c0_i32_0 = arith.constant 0 : i32
    %c0_i32_1 = arith.constant 0 : i32
    return %c0_i32, %c0_i32_0 : i32, i32
  }
  func.func @transform_7(%arg0: i32) -> (i32, i32) {
    %c0_i32 = arith.constant 0 : i32
    %c0_i32_0 = arith.constant 0 : i32
    return %c0_i32, %arg0 : i32, i32
  }
}

</mosaic_0001>

<llo_original>
// kernel: tpu_custom_call.1
$region0: #{tpu_custom_call.1}
  #allocation0 [shape = 'u32[]', space=smem, size = 0x4, offset = 0x4, fixed_abs, tag = 'smem constant byte address 0x4 - core index']
  #allocation1 [shape = 'u32[72,128]{1,0:T(1,128)}', space=vmem, size = 0x9000, scoped, tag = 'internal scratch']
  %s0 = inlined_call_operand.vmem [shape: f32[16,256], index: 0, kind: input, shape index: {}]
  %s1 = inlined_call_operand.vmem [shape: f32[32,16], index: 1, kind: input, shape index: {}]
  %s2 = inlined_call_operand.vmem [shape: f32[32,1], index: 2, kind: input, shape index: {}]
  %s3 = inlined_call_operand.vmem [shape: f32[32,32], index: 3, kind: input, shape index: {}]
  %s4 = inlined_call_operand.vmem [shape: f32[32,1], index: 4, kind: input, shape index: {}]
  %s5 = inlined_call_operand.vmem [shape: f32[8,32], index: 5, kind: input, shape index: {}]
  %s6 = inlined_call_operand.vmem [shape: f32[8,1], index: 6, kind: input, shape index: {}]
  %s7 = inlined_call_operand.hbm [shape: f32[8,256], index: 7, kind: output, shape index: {}]
  %s8 = sld [smem:[#allocation0]]
  $region38: #{tpu_custom_call.1} parent=0
    _
  %s10 = ssub.s32 1, %s8
  %s11 = scalar_select 0, %s10, %s8
  $region1: #{tpu_custom_call.1} parent=0
    #allocation2 [shape = 'u8[8192]{0}', space=vmem, size = 0x2000, scoped, tag = 'output window, operand 0, single buffered']
    #allocation3 [shape = 's32[1]{0}', space=sflag, size = 0x4, scoped, tag = 'scoped memory for tpu_custom_call.1']
    %12 = vsyncpa [#allocation3], 0
    // Predicated region
    $region2: #{tpu_custom_call.1} parent=1 // pred_check
      _
    $region3: #{tpu_custom_call.1} parent=1 // pred_check_branch
      %14 = sbr.rel (0) target = $region5
    $region4: #{tpu_custom_call.1} parent=1 // pred_region
      _
    $region5: #{tpu_custom_call.1} parent=1 // pred_fallthru
      _
    // Predicated region
    $region6: #{tpu_custom_call.1} parent=1 // pred_check
      _
    $region7: #{tpu_custom_call.1} parent=1 // pred_check_branch
      %16 = sbr.rel (0) target = $region9
    $region8: #{tpu_custom_call.1} parent=1 // pred_region
      _
    $region9: #{tpu_custom_call.1} parent=1 // pred_fallthru
      _
    // Predicated region
    $region10: #{tpu_custom_call.1} parent=1 // pred_check
      _
    $region11: #{tpu_custom_call.1} parent=1 // pred_check_branch
      %18 = sbr.rel (0) target = $region13
    $region12: #{tpu_custom_call.1} parent=1 // pred_region
      _
    $region13: #{tpu_custom_call.1} parent=1 // pred_fallthru
      _
    // Predicated region
    $region14: #{tpu_custom_call.1} parent=1 // pred_check
      _
    $region15: #{tpu_custom_call.1} parent=1 // pred_check_branch
      %20 = sbr.rel (0) target = $region17
    $region16: #{tpu_custom_call.1} parent=1 // pred_region
      _
    $region17: #{tpu_custom_call.1} parent=1 // pred_fallthru
      _
    // Predicated region
    $region18: #{tpu_custom_call.1} parent=1 // pred_check
      _
    $region19: #{tpu_custom_call.1} parent=1 // pred_check_branch
      %22 = sbr.rel (0) target = $region21
    $region20: #{tpu_custom_call.1} parent=1 // pred_region
      _
    $region21: #{tpu_custom_call.1} parent=1 // pred_fallthru
      _
    // Predicated region
    $region22: #{tpu_custom_call.1} parent=1 // pred_check
      _
    $region23: #{tpu_custom_call.1} parent=1 // pred_check_branch
      %24 = sbr.rel (0) target = $region25
    $region24: #{tpu_custom_call.1} parent=1 // pred_region
      _
    $region25: #{tpu_custom_call.1} parent=1 // pred_fallthru
      _
    // Predicated region
    $region26: #{tpu_custom_call.1} parent=1 // pred_check
      _
    $region27: #{tpu_custom_call.1} parent=1 // pred_check_branch
      %26 = sbr.rel (0) target = $region29
    $region28: #{tpu_custom_call.1} parent=1 // pred_region
      _
    $region29: #{tpu_custom_call.1} parent=1 // pred_fallthru
      _
    %v27 = vld [vmem:[%s1] sm:$0xff]
    %v28 = vld [vmem:[%s1 + $0x8] sm:$0xff]
    %v29 = vld [vmem:[%s1 + $0x10] sm:$0xff]
    %v30 = vld [vmem:[%s1 + $0x18] sm:$0xff]
    %v31 = vld [vmem:[%s3] sm:$0xff]
    %v32 = vld [vmem:[%s3 + $0x8] sm:$0xff]
    %v33 = vld [vmem:[%s3 + $0x10] sm:$0xff]
    %v34 = vld [vmem:[%s3 + $0x18] sm:$0xff]
    %v35 = vld [vmem:[%s5] sm:$0xff]
    %v36 = vld [vmem:[%s2] sm:$0xff]
    %v37 = vld [vmem:[%s2 + $0x8] sm:$0xff]
    %v38 = vld [vmem:[%s2 + $0x10] sm:$0xff]
    %v39 = vld [vmem:[%s2 + $0x18] sm:$0xff]
    %v40 = vld [vmem:[%s4] sm:$0xff]
    %v41 = vld [vmem:[%s4 + $0x8] sm:$0xff]
    %v42 = vld [vmem:[%s4 + $0x10] sm:$0xff]
    %v43 = vld [vmem:[%s4 + $0x18] sm:$0xff]
    %v44 = vld [vmem:[%s6] sm:$0xff]
    %v45 = vld [vmem:[%s0] sm:$0xff]
    %v46 = vld [vmem:[%s0 + $0x8] sm:$0xff]
    %v47 = vld [vmem:[%s0 + $0x10] sm:$0xff]
    %v48 = vld [vmem:[%s0 + $0x18] sm:$0xff]
    %50 = vset.pattern.permute.xlu0 0
    %51 = vperm.xlu0 %50, %v36
    %v52 = vpop.permute.xlu0 %51
    %55 = vset.pattern.permute.xlu0 0
    %56 = vperm.xlu0 %55, %v37
    %v57 = vpop.permute.xlu0 %56
    %60 = vset.pattern.permute.xlu0 0
    %61 = vperm.xlu0 %60, %v38
    %v62 = vpop.permute.xlu0 %61
    %65 = vset.pattern.permute.xlu0 0
    %66 = vperm.xlu0 %65, %v39
    %v67 = vpop.permute.xlu0 %66
    %vm69 = vcmask 130048
    %v71 = vsel %vm69, %v27, 0
    %v74 = vsel %vm69, %v28, 0
    %v77 = vsel %vm69, %v29, 0
    %v80 = vsel %vm69, %v30, 0
    %82 = vmatpush.msra.mxu0 0.0
    %83 = vmatpush.msra.mxu0 0.0
    %84 = vmatpush.msra.mxu0 0.0
    %85 = vmatpush.msra.mxu0 0.0
    %86 = vmatpush.msra.mxu0 0.0
    %87 = vmatpush.msra.mxu0 0.0
    %88 = vmatpush.msra.mxu0 0.0
    %89 = vmatpush.msra.mxu0 0.0
    %90 = vmatpush.msra.mxu0 0.0
    %91 = vmatpush.msra.mxu0 0.0
    %92 = vmatpush.msra.mxu0 0.0
    %93 = vmatpush.msra.mxu0 0.0
    %94 = vmatpush.msra.mxu0 0.0
    %95 = vmatpush.msra.mxu0 0.0
    %96 = vmatpush.msra.mxu0 %v47
    %97 = vmatpush.msra.mxu0 %v45
    %98 = vmatmul.f32.gmra.mxu0 %v71
    %v99 = vpop.f32.mrf.mxu0
    %v100 = vadd.f32 %v52, %v99
    %101 = vmatmul.f32.gmra.mxu0 %v74
    %v102 = vpop.f32.mrf.mxu0
    %v103 = vadd.f32 %v57, %v102
    %104 = vmatmul.f32.gmra.mxu0 %v77
    %v105 = vpop.f32.mrf.mxu0
    %v106 = vadd.f32 %v62, %v105
    %107 = vmatmul.f32.gmra.mxu0 %v80
    %v108 = vpop.f32.mrf.mxu0
    %v109 = vadd.f32 %v67, %v108
    %110 = vdwg.mxu0
    %111 = vmatpush.msra.mxu0 0.0
    %112 = vmatpush.msra.mxu0 0.0
    %113 = vmatpush.msra.mxu0 0.0
    %114 = vmatpush.msra.mxu0 0.0
    %115 = vmatpush.msra.mxu0 0.0
    %116 = vmatpush.msra.mxu0 0.0
    %117 = vmatpush.msra.mxu0 0.0
    %118 = vmatpush.msra.mxu0 0.0
    %119 = vmatpush.msra.mxu0 0.0
    %120 = vmatpush.msra.mxu0 0.0
    %121 = vmatpush.msra.mxu0 0.0
    %122 = vmatpush.msra.mxu0 0.0
    %123 = vmatpush.msra.mxu0 0.0
    %124 = vmatpush.msra.mxu0 0.0
    %125 = vmatpush.msra.mxu0 %v48
    %126 = vmatpush.msra.mxu0 %v46
    %127 = vmatmul.f32.gmra.mxu0 %v71
    %v128 = vpop.f32.mrf.mxu0
    %v129 = vadd.f32 %v52, %v128
    %130 = vmatmul.f32.gmra.mxu0 %v74
    %v131 = vpop.f32.mrf.mxu0
    %v132 = vadd.f32 %v57, %v131
    %133 = vmatmul.f32.gmra.mxu0 %v77
    %v134 = vpop.f32.mrf.mxu0
    %v135 = vadd.f32 %v62, %v134
    %136 = vmatmul.f32.gmra.mxu0 %v80
    %v137 = vpop.f32.mrf.mxu0
    %v138 = vadd.f32 %v67, %v137
    %139 = vdwg.mxu0
    %v140 = vmax.f32 %v100, 0.0
    %v141 = vmax.f32 %v129, 0.0
    %v142 = vmax.f32 %v103, 0.0
    %v143 = vmax.f32 %v132, 0.0
    %v144 = vmax.f32 %v106, 0.0
    %v145 = vmax.f32 %v135, 0.0
    %v146 = vmax.f32 %v109, 0.0
    %v147 = vmax.f32 %v138, 0.0
    %149 = vset.pattern.permute.xlu0 0
    %150 = vperm.xlu0 %149, %v40
    %v151 = vpop.permute.xlu0 %150
    %154 = vset.pattern.permute.xlu0 0
    %155 = vperm.xlu0 %154, %v41
    %v156 = vpop.permute.xlu0 %155
    %159 = vset.pattern.permute.xlu0 0
    %160 = vperm.xlu0 %159, %v42
    %v161 = vpop.permute.xlu0 %160
    %164 = vset.pattern.permute.xlu0 0
    %165 = vperm.xlu0 %164, %v43
    %v166 = vpop.permute.xlu0 %165
    %vm168 = vcmask 261120
    %v170 = vsel %vm168, %v31, 0
    %v173 = vsel %vm168, %v32, 0
    %v176 = vsel %vm168, %v33, 0
    %v179 = vsel %vm168, %v34, 0
    %181 = vmatpush.msra.mxu0 0.0
    %182 = vmatpush.msra.mxu0 0.0
    %183 = vmatpush.msra.mxu0 0.0
    %184 = vmatpush.msra.mxu0 0.0
    %185 = vmatpush.msra.mxu0 0.0
    %186 = vmatpush.msra.mxu0 0.0
    %187 = vmatpush.msra.mxu0 0.0
    %188 = vmatpush.msra.mxu0 0.0
    %189 = vmatpush.msra.mxu0 0.0
    %190 = vmatpush.msra.mxu0 0.0
    %191 = vmatpush.msra.mxu0 0.0
    %192 = vmatpush.msra.mxu0 0.0
    %193 = vmatpush.msra.mxu0 %v146
    %194 = vmatpush.msra.mxu0 %v144
    %195 = vmatpush.msra.mxu0 %v142
    %196 = vmatpush.msra.mxu0 %v140
    %197 = vmatmul.f32.gmra.mxu0 %v170
    %v198 = vpop.f32.mrf.mxu0
    %v199 = vadd.f32 %v151, %v198
    %200 = vmatmul.f32.gmra.mxu0 %v173
    %v201 = vpop.f32.mrf.mxu0
    %v202 = vadd.f32 %v156, %v201
    %203 = vmatmul.f32.gmra.mxu0 %v176
    %v204 = vpop.f32.mrf.mxu0
    %v205 = vadd.f32 %v161, %v204
    %206 = vmatmul.f32.gmra.mxu0 %v179
    %v207 = vpop.f32.mrf.mxu0
    %v208 = vadd.f32 %v166, %v207
    %209 = vdwg.mxu0
    %210 = vmatpush.msra.mxu0 0.0
    %211 = vmatpush.msra.mxu0 0.0
    %212 = vmatpush.msra.mxu0 0.0
    %213 = vmatpush.msra.mxu0 0.0
    %214 = vmatpush.msra.mxu0 0.0
    %215 = vmatpush.msra.mxu0 0.0
    %216 = vmatpush.msra.mxu0 0.0
    %217 = vmatpush.msra.mxu0 0.0
    %218 = vmatpush.msra.mxu0 0.0
    %219 = vmatpush.msra.mxu0 0.0
    %220 = vmatpush.msra.mxu0 0.0
    %221 = vmatpush.msra.mxu0 0.0
    %222 = vmatpush.msra.mxu0 %v147
    %223 = vmatpush.msra.mxu0 %v145
    %224 = vmatpush.msra.mxu0 %v143
    %225 = vmatpush.msra.mxu0 %v141
    %226 = vmatmul.f32.gmra.mxu0 %v170
    %v227 = vpop.f32.mrf.mxu0
    %v228 = vadd.f32 %v151, %v227
    %229 = vmatmul.f32.gmra.mxu0 %v173
    %v230 = vpop.f32.mrf.mxu0
    %v231 = vadd.f32 %v156, %v230
    %232 = vmatmul.f32.gmra.mxu0 %v176
    %v233 = vpop.f32.mrf.mxu0
    %v234 = vadd.f32 %v161, %v233
    %235 = vmatmul.f32.gmra.mxu0 %v179
    %v236 = vpop.f32.mrf.mxu0
    %v237 = vadd.f32 %v166, %v236
    %238 = vdwg.mxu0
    %v239 = vmax.f32 %v199, 0.0
    %v240 = vmax.f32 %v228, 0.0
    %v241 = vmax.f32 %v202, 0.0
    %v242 = vmax.f32 %v231, 0.0
    %v243 = vmax.f32 %v205, 0.0
    %v244 = vmax.f32 %v234, 0.0
    %v245 = vmax.f32 %v208, 0.0
    %v246 = vmax.f32 %v237, 0.0
    %248 = vset.pattern.permute.xlu0 0
    %249 = vperm.xlu0 %248, %v44
    %v250 = vpop.permute.xlu0 %249
    %v253 = vsel %vm168, %v35, 0
    %255 = vmatpush.msra.mxu0 0.0
    %256 = vmatpush.msra.mxu0 0.0
    %257 = vmatpush.msra.mxu0 0.0
    %258 = vmatpush.msra.mxu0 0.0
    %259 = vmatpush.msra.mxu0 0.0
    %260 = vmatpush.msra.mxu0 0.0
    %261 = vmatpush.msra.mxu0 0.0
    %262 = vmatpush.msra.mxu0 0.0
    %263 = vmatpush.msra.mxu0 0.0
    %264 = vmatpush.msra.mxu0 0.0
    %265 = vmatpush.msra.mxu0 0.0
    %266 = vmatpush.msra.mxu0 0.0
    %267 = vmatpush.msra.mxu0 %v245
    %268 = vmatpush.msra.mxu0 %v243
    %269 = vmatpush.msra.mxu0 %v241
    %270 = vmatpush.msra.mxu0 %v239
    %271 = vmatmul.f32.gmra.mxu0 %v253
    %v272 = vpop.f32.mrf.mxu0
    %v273 = vadd.f32 %v250, %v272
    %274 = vdwg.mxu0
    %275 = vmatpush.msra.mxu0 0.0
    %276 = vmatpush.msra.mxu0 0.0
    %277 = vmatpush.msra.mxu0 0.0
    %278 = vmatpush.msra.mxu0 0.0
    %279 = vmatpush.msra.mxu0 0.0
    %280 = vmatpush.msra.mxu0 0.0
    %281 = vmatpush.msra.mxu0 0.0
    %282 = vmatpush.msra.mxu0 0.0
    %283 = vmatpush.msra.mxu0 0.0
    %284 = vmatpush.msra.mxu0 0.0
    %285 = vmatpush.msra.mxu0 0.0
    %286 = vmatpush.msra.mxu0 0.0
    %287 = vmatpush.msra.mxu0 %v246
    %288 = vmatpush.msra.mxu0 %v244
    %289 = vmatpush.msra.mxu0 %v242
    %290 = vmatpush.msra.mxu0 %v240
    %291 = vmatmul.f32.gmra.mxu0 %v253
    %v292 = vpop.f32.mrf.mxu0
    %v293 = vadd.f32 %v250, %v292
    %294 = vdwg.mxu0
    %295 = vst [vmem:[#allocation2] sm:$0xff] %v273
    %296 = vst [vmem:[#allocation2 + $0x8] sm:$0xff] %v293
    // Predicated region
    $region30: #{tpu_custom_call.1} parent=1 // pred_check
      _
    $region31: #{tpu_custom_call.1} parent=1 // pred_check_branch
      %298 = sbr.rel (0) target = $region33
    $region32: #{tpu_custom_call.1} parent=1 // pred_region
      %300 = vsyncadd [#allocation3], 0
      %s302 = sshll.u32 [#allocation2], 4
      %s303 = int_to_ptr.vmem [resolvable:$true] %s302
      %s304 = sshll.u32 %s7, 4
      %s305 = int_to_ptr.hbm [resolvable:$true] %s304
      %307 = dma.vmem_to_hbm [thread:$0]  %s303, 256, %s305, [#allocation3]
    $region33: #{tpu_custom_call.1} parent=1 // pred_fallthru
      _
    // Predicated region
    $region34: #{tpu_custom_call.1} parent=1 // pred_check
      _
    $region35: #{tpu_custom_call.1} parent=1 // pred_check_branch
      %309 = sbr.rel (0) target = $region37
    $region36: #{tpu_custom_call.1} parent=1 // pred_region
      %311 = dma.done [#allocation3], 256
    $region37: #{tpu_custom_call.1} parent=1 // pred_fallthru
      _
    %312 = vsyncpa [#allocation3], 1

</llo_original>
